<compile_context>
chip_gen: v5e
topology: v5e:2x2
jax: 0.10.0
libtpu: 0.0.40
codegen_flags: <defaults>
</compile_context>

<pallas_src>
import jax
import jax.numpy as jnp
from jax.experimental import pallas as pl
from jax.experimental.pallas import tpu as pltpu


def _round_up(x, m):
    return ((x + m - 1) // m) * m


def _choose_tiling(max_m, k_pad, n_fns):
    """Padded residual length and M-tile size (tile always divides the pad).

    tile_m targets <= ~8 MiB per J^T block buffer (double-buffered by the
    BlockSpec pipeline), so the kernel stays within the scoped VMEM budget on
    v5e/v6e/v7x while keeping per-step overhead amortized over large tiles.
    """
    budget_bytes = 8 * 1024 * 1024
    tile_cap = (budget_bytes // (max(k_pad, 1) * max(n_fns, 1) * 4)) // 128 * 128
    tile_cap = max(128, min(tile_cap, 4096))
    m_pad_min = _round_up(max_m, 128)
    if m_pad_min <= tile_cap:
        return m_pad_min, m_pad_min
    tile_m = tile_cap
    m_pad = _round_up(max_m, tile_m)
    return m_pad, tile_m


# ----------------------------------------------------------------------------
# Fused Pallas kernel:  total = sum_i || Jw_i @ p_i - bw_i ||^2
# (sqrt(weight) already folded into Jw_i / bw_i).
#   grid = (m_tiles,);  all n_fns members handled inside each grid step.
# ----------------------------------------------------------------------------
def _composite_cost_kernel(jt_ref, p_ref, b_ref, out_ref, acc_ref):
    m = pl.program_id(0)

    @pl.when(m == 0)
    def _():
        acc_ref[...] = jnp.zeros_like(acc_ref)

    jt = jt_ref[...]                  # (n_fns, K_pad, TM)  J^T slab (K sublanes, M lanes)
    p = p_ref[...]                    # (n_fns, K_pad, 1)   zero-padded sub-parameter columns
    b = b_ref[...]                    # (n_fns, 1, TM)      zero-padded targets

    k_pad = jt.shape[1]
    if k_pad >= 128:
        # Non-trivial K: do the K-reduction on the (otherwise idle) MXU.
        r = jax.lax.dot_general(
            p, jt,
            dimension_numbers=(((1,), (1,)), ((0,), (0,))),
            preferred_element_type=jnp.float32)          # (n_fns, 1, TM)
        r = r[:, 0, :] - b[:, 0, :]                      # (n_fns, TM)
    else:
        # Tiny K: lane-dense VPU broadcast-multiply + sublane reduce.
        r = jnp.sum(jt * p, axis=1) - b[:, 0, :]         # (n_fns, TM)

    # Lane-dense vector partial sums; no scalar chain in the hot loop.
    acc_ref[...] += jnp.sum(r * r, axis=0, keepdims=True)   # (1, TM)

    @pl.when(m == pl.num_programs(0) - 1)
    def _():
        out_ref[0, 0] = jnp.sum(acc_ref[...])            # single cross-lane reduce


def _fused_composite_cost(jt_all, p_all, b_all, tile_m):
    """sum_i || jt_all[i].T @ p_all[i] - b_all[i] ||^2 in one pallas_call."""
    n_fns, k_pad, m_pad = jt_all.shape
    assert m_pad % tile_m == 0
    n_m_tiles = m_pad // tile_m

    out = pl.pallas_call(
        _composite_cost_kernel,
        out_shape=jax.ShapeDtypeStruct((1, 1), jnp.float32),
        grid=(n_m_tiles,),
        in_specs=[
            pl.BlockSpec((n_fns, k_pad, tile_m), lambda m: (0, 0, m)),   # J^T slab tile
            pl.BlockSpec((n_fns, k_pad, 1),      lambda m: (0, 0, 0)),   # param columns
            pl.BlockSpec((n_fns, 1, tile_m),     lambda m: (0, 0, m)),   # b tile
        ],
        out_specs=pl.BlockSpec(memory_space=pltpu.SMEM),                 # (1,1) scalar
        scratch_shapes=[pltpu.VMEM((1, tile_m), jnp.float32)],           # vector acc
        compiler_params=pltpu.CompilerParams(
            dimension_semantics=("arbitrary",),        # shared accumulator across steps
            vmem_limit_bytes=48 * 1024 * 1024),
    )(jt_all, p_all, b_all)
    return out[0, 0]


# ----------------------------------------------------------------------------
# Member cost function (concrete realization of the abstract CostFunction).
# ----------------------------------------------------------------------------
class LinearLeastSquaresCost:
    """cost(params, weight) = weight * sum((J @ params - b)^2)."""

    def __init__(self, J, b, name="LLS"):
        self.name = name
        self.J = jnp.asarray(J, dtype=jnp.float32)   # raw (M, K), cast once
        self.b = jnp.asarray(b, dtype=jnp.float32)   # raw (M,)
        self.n_residuals, self.n_params = self.J.shape

        # Kernel-ready padded / transposed layout, built ONCE: K -> sublane
        # multiple, M -> lane multiple, so all VMEM loads are full tiles.
        self._k_pad = _round_up(self.n_params, 8)
        self._m_pad, self._tile_m = _choose_tiling(self.n_residuals, self._k_pad, 1)
        jt = (jnp.zeros((1, self._k_pad, self._m_pad), jnp.float32)
              .at[0, :self.n_params, :self.n_residuals].set(self.J.T))
        bp = (jnp.zeros((1, 1, self._m_pad), jnp.float32)
              .at[0, 0, :self.n_residuals].set(self.b))

        k_pad, tile_m, n_p = self._k_pad, self._tile_m, self.n_params

        def _call_impl(params, weight):
            p = (jnp.zeros((k_pad,), jnp.float32)
                 .at[:n_p].set(params.astype(jnp.float32)))
            unweighted = _fused_composite_cost(jt, p.reshape(1, k_pad, 1), bp, tile_m)
            return jnp.float32(weight) * unweighted

        self._call_jit = jax.jit(_call_impl)

    def __call__(self, params, weight=1.0, **kwargs):
        return self._call_jit(params, weight)

    # pure-JAX reference (for correctness checking only)
    def reference(self, params, weight=1.0):
        r = jnp.dot(self.J, params.astype(jnp.float32),
                    precision=jax.lax.Precision.HIGHEST) - self.b
        return weight * jnp.sum(r * r)


# ----------------------------------------------------------------------------
# CompositeCostFunction (forward pass semantics of the PyTorch module).
# ----------------------------------------------------------------------------
class CompositeCostFunction:
    name = "CompositeCost"

    def __init__(self, cost_functions, param_mappings=None, weights=None, **kwargs):
        self.cost_functions = cost_functions
        self.param_mappings = param_mappings
        if param_mappings is not None:
            assert len(param_mappings) == len(cost_functions), (
                "Number of parameter mappings must match number of cost functions")
        self.weights = list(weights) if weights is not None else [1.0] * len(cost_functions)
        assert all(w >= 0 for w in self.weights), "least-squares weights must be >= 0"
        self.kwargs = kwargs

        # ---- fused kernel-ready layout, built ONCE (not per forward) ----
        # sqrt(weight_i) is folded into J_i and b_i:  w*||Jp-b||^2 == ||sw*Jp - sw*b||^2.
        n_fns = len(cost_functions)
        self._n_fns = n_fns
        self._k_pad = _round_up(max(cf.n_params for cf in cost_functions), 8)
        max_m = max(cf.n_residuals for cf in cost_functions)
        self._m_pad, self._tile_m = _choose_tiling(max_m, self._k_pad, n_fns)
        # TODO(synk): for strongly heterogeneous member sizes a ragged (concat
        # along M + scalar-prefetch index map) layout avoids padded HBM traffic.

        jt_all = jnp.zeros((n_fns, self._k_pad, self._m_pad), jnp.float32)
        b_all = jnp.zeros((n_fns, 1, self._m_pad), jnp.float32)
        for i, cf in enumerate(cost_functions):
            sw = float(self.weights[i]) ** 0.5
            jt_all = jt_all.at[i, :cf.n_params, :cf.n_residuals].set(sw * cf.J.T)
            b_all = b_all.at[i, 0, :cf.n_residuals].set(sw * cf.b)
        self._jt_all = jt_all
        self._b_all = b_all

        n_pars = [cf.n_params for cf in cost_functions]
        mappings = param_mappings
        k_pad, tile_m = self._k_pad, self._tile_m

        def _forward_impl(params):
            cols = []
            for i in range(n_fns):
                mapping = mappings[i] if mappings is not None else None
                p_i = self._extract_params(params, mapping).astype(jnp.float32)
                cols.append(jnp.zeros((k_pad,), jnp.float32).at[:n_pars[i]].set(p_i))
            p_all = jnp.stack(cols).reshape(n_fns, k_pad, 1)
            return _fused_composite_cost(jt_all, p_all, b_all, tile_m)

        # Whole forward path (slice glue + pallas_call) under a single jit.
        self._forward_jit = jax.jit(_forward_impl)

    def _extract_params(self, params, mapping):
        if mapping is None:
            return params
        extracted = []
        for _key, index_or_slice in mapping.items():
            if isinstance(index_or_slice, slice):
                extracted.append(params[index_or_slice].reshape(-1))
            else:
                extracted.append(params[index_or_slice:index_or_slice + 1])
        return jnp.concatenate(extracted)

    def forward(self, params, **kwargs):
        return self._forward_jit(params)

    __call__ = forward

    # pure-JAX reference for correctness checking
    def forward_reference(self, params):
        total = jnp.float32(0.0)
        for i, cf in enumerate(self.cost_functions):
            mapping = self.param_mappings[i] if self.param_mappings is not None else None
            p_i = self._extract_params(params, mapping)
            total = total + cf.reference(p_i, weight=self.weights[i])
        return total


# ----------------------------------------------------------------------------
# Main: deterministic synthetic setup, run once, verify, print KERNEL_OK.
# ----------------------------------------------------------------------------
if __name__ == "__main__":
    key = jax.random.PRNGKey(0)
    k_p, k_j0, k_b0, k_j1, k_b1 = jax.random.split(key, 5)

    n_params = 32                       # full parameter vector length
    params = jax.random.normal(k_p, (n_params,), dtype=jnp.float32)

    # Cost function 0: uses params[0:16], 64 residuals ("BA"-like).
    J0 = jax.random.normal(k_j0, (64, 16), dtype=jnp.float32)
    b0 = jax.random.normal(k_b0, (64,), dtype=jnp.float32)
    cost0 = LinearLeastSquaresCost(J0, b0, name="BA")

    # Cost function 1: uses params[8:32], 96 residuals ("P2P"-like).
    J1 = jax.random.normal(k_j1, (96, 24), dtype=jnp.float32)
    b1 = jax.random.normal(k_b1, (96,), dtype=jnp.float32)
    cost1 = LinearLeastSquaresCost(J1, b1, name="P2P")

    composite = CompositeCostFunction(
        cost_functions=[cost0, cost1],
        param_mappings=[{"cams": slice(0, 16)}, {"pts": slice(8, 32)}],
        weights=[0.5, 2.0],
    )

    total = composite.forward(params)
    total = jax.block_until_ready(total)

    ref = composite.forward_reference(params)
    assert jnp.allclose(total, ref, rtol=1e-4, atol=1e-2), (total, ref)

    # Standalone member-cost path (same fused kernel, n_fns=1, runtime weight).
    single = jax.block_until_ready(cost0(params[0:16], weight=0.5))
    single_ref = cost0.reference(params[0:16], weight=0.5)
    assert jnp.allclose(single, single_ref, rtol=1e-4, atol=1e-2), (single, single_ref)

    # TODO(synk): jacobian() assembles a torch.sparse_coo_tensor and remaps
    # sparse column indices; sparse COO assembly (and the wandb logging in
    # forward_from_residuals) has no clean Pallas equivalent and is not part
    # of forward().

    print("KERNEL_OK")
</pallas_src>

<mosaic_0001>
module attributes {stable_mosaic.version = 11 : i64} {
  func.func @_composite_cost_kernel(%arg0: i32, %arg1: memref<2x24x128xf32, #tpu.memory_space<vmem>>, %arg2: memref<2x24x1xf32, #tpu.memory_space<vmem>>, %arg3: memref<2x1x128xf32, #tpu.memory_space<vmem>>, %arg4: memref<1x1xf32, #tpu.memory_space<smem>>, %arg5: memref<1x128xf32, #tpu.memory_space<vmem>>) attributes {dimension_semantics = [#tpu.dimension_semantics<arbitrary>], iteration_bounds = array<i64: 1>, scalar_prefetch = 0 : i64, scratch_operands = 1 : i64, tpu.core_type = #tpu.core_type<tc>, window_params = [{transform_indices = @transform_0, window_bounds = array<i64: 2, 24, 128>}, {pipeline_mode = #tpu.pipeline_mode<synchronous>, transform_indices = @transform_1, window_bounds = array<i64: 2, 24, 1>}, {transform_indices = @transform_2, window_bounds = array<i64: 2, 1, 128>}, {transform_indices = @transform_3, window_bounds = array<i64: 1, 1>}]} {
    %c0_i32 = arith.constant 0 : i32
    %0 = arith.cmpi eq, %arg0, %c0_i32 : i32
    %1 = arith.extui %0 : i1 to i32
    %c0_i32_0 = arith.constant 0 : i32
    %2 = arith.cmpi ne, %1, %c0_i32_0 : i32
    scf.if %2 {
      %cst_16 = arith.constant 0.000000e+00 : f32
      %20 = vector.broadcast %cst_16 : f32 to vector<1x128xf32>
      %c0_17 = arith.constant 0 : index
      %c0_18 = arith.constant 0 : index
      %21 = vector.load %arg5[%c0_17, %c0_18] : memref<1x128xf32, #tpu.memory_space<vmem>>, vector<1x128xf32>
      tpu.vector_store %arg5[%c0_17, %c0_18], %20 {strides = array<i32>} : memref<1x128xf32, #tpu.memory_space<vmem>>, vector<1x128xf32>,
    } else {
    }
    %c0 = arith.constant 0 : index
    %c0_1 = arith.constant 0 : index
    %c0_2 = arith.constant 0 : index
    %3 = vector.load %arg1[%c0, %c0_1, %c0_2] : memref<2x24x128xf32, #tpu.memory_space<vmem>>, vector<2x24x128xf32>
    %c0_3 = arith.constant 0 : index
    %c0_4 = arith.constant 0 : index
    %c0_5 = arith.constant 0 : index
    %4 = vector.load %arg2[%c0_3, %c0_4, %c0_5] : memref<2x24x1xf32, #tpu.memory_space<vmem>>, vector<2x24x1xf32>
    %c0_6 = arith.constant 0 : index
    %c0_7 = arith.constant 0 : index
    %c0_8 = arith.constant 0 : index
    %5 = vector.load %arg3[%c0_6, %c0_7, %c0_8] : memref<2x1x128xf32, #tpu.memory_space<vmem>>, vector<2x1x128xf32>
    %6 = vector.broadcast %4 : vector<2x24x1xf32> to vector<2x24x128xf32>
    %7 = arith.mulf %3, %6 : vector<2x24x128xf32>
    %cst = arith.constant dense<0.000000e+00> : vector<2x128xf32>
    %8 = vector.multi_reduction <add>, %7, %cst [1] : vector<2x24x128xf32> to vector<2x128xf32>
    %9 = vector.shape_cast %5 : vector<2x1x128xf32> to vector<2x128xf32>
    %10 = arith.subf %8, %9 : vector<2x128xf32>
    %c0_9 = arith.constant 0 : index
    %c0_10 = arith.constant 0 : index
    %11 = vector.load %arg5[%c0_9, %c0_10] : memref<1x128xf32, #tpu.memory_space<vmem>>, vector<1x128xf32>
    %12 = arith.mulf %10, %10 : vector<2x128xf32>
    %cst_11 = arith.constant dense<0.000000e+00> : vector<128xf32>
    %13 = vector.multi_reduction <add>, %12, %cst_11 [0] : vector<2x128xf32> to vector<128xf32>
    %14 = vector.shape_cast %13 : vector<128xf32> to vector<1x128xf32>
    %15 = arith.addf %11, %14 : vector<1x128xf32>
    %c0_12 = arith.constant 0 : index
    %c0_13 = arith.constant 0 : index
    %16 = vector.load %arg5[%c0_12, %c0_13] : memref<1x128xf32, #tpu.memory_space<vmem>>, vector<1x128xf32>
    tpu.vector_store %arg5[%c0_12, %c0_13], %15 {strides = array<i32>} : memref<1x128xf32, #tpu.memory_space<vmem>>, vector<1x128xf32>,
    %c0_i32_14 = arith.constant 0 : i32
    %17 = arith.cmpi eq, %arg0, %c0_i32_14 : i32
    %18 = arith.extui %17 : i1 to i32
    %c0_i32_15 = arith.constant 0 : i32
    %19 = arith.cmpi ne, %18, %c0_i32_15 : i32
    scf.if %19 {
      %c0_16 = arith.constant 0 : index
      %c0_17 = arith.constant 0 : index
      %20 = vector.load %arg5[%c0_16, %c0_17] : memref<1x128xf32, #tpu.memory_space<vmem>>, vector<1x128xf32>
      %21 = vector.shape_cast %20 : vector<1x128xf32> to vector<1x1x128xf32>
      %cst_18 = arith.constant dense<0.000000e+00> : vector<1xf32>
      %22 = vector.multi_reduction <add>, %21, %cst_18 [1, 2] : vector<1x1x128xf32> to vector<1xf32>
      %23 = vector.shape_cast %22 : vector<1xf32> to vector<1x1x1xf32>
      %24 = vector.extract %23[0, 0, 0] : f32 from vector<1x1x1xf32>
      %c0_19 = arith.constant 0 : index
      %c0_20 = arith.constant 0 : index
      %25 = memref.load %arg4[%c0_19, %c0_20] : memref<1x1xf32, #tpu.memory_space<smem>>
      memref.store %24, %arg4[%c0_19, %c0_20] : memref<1x1xf32, #tpu.memory_space<smem>>
    } else {
    }
    return
  }
  func.func @transform_0(%arg0: i32) -> (i32, i32, i32) {
    %c0_i32 = arith.constant 0 : i32
    %c0_i32_0 = arith.constant 0 : i32
    %c0_i32_1 = arith.constant 0 : i32
    return %c0_i32, %c0_i32_0, %arg0 : i32, i32, i32
  }
  func.func @transform_1(%arg0: i32) -> (i32, i32, i32) {
    %c0_i32 = arith.constant 0 : i32
    %c0_i32_0 = arith.constant 0 : i32
    %c0_i32_1 = arith.constant 0 : i32
    %c0_i32_2 = arith.constant 0 : i32
    return %c0_i32, %c0_i32_0, %c0_i32_1 : i32, i32, i32
  }
  func.func @transform_2(%arg0: i32) -> (i32, i32, i32) {
    %c0_i32 = arith.constant 0 : i32
    %c0_i32_0 = arith.constant 0 : i32
    %c0_i32_1 = arith.constant 0 : i32
    return %c0_i32, %c0_i32_0, %arg0 : i32, i32, i32
  }
  func.func @transform_3(%arg0: i32) -> (i32, i32) {
    %c0_i32 = arith.constant 0 : i32
    %c0_i32_0 = arith.constant 0 : i32
    %c0_i32_1 = arith.constant 0 : i32
    return %c0_i32, %c0_i32_0 : i32, i32
  }
}

</mosaic_0001>

<llo_original>
// kernel: _forward_impl.1
$region0: #{_forward_impl.1}
  #allocation0 [shape = 'u32[]', space=smem, size = 0x4, offset = 0x4, fixed_abs, tag = 'smem constant byte address 0x4 - core index']
  #allocation1 [shape = 'u32[72,128]{1,0:T(1,128)}', space=vmem, size = 0x9000, scoped, tag = 'internal scratch']
  #allocation2 [shape = 'f32[1,128]{1,0:T(1,128)}', space=vmem, size = 0x200, scoped, tag = 'scratch operand']
  %s0 = inlined_call_operand.vmem [shape: f32[2,24,128], index: 0, kind: input, shape index: {}]
  %s1 = inlined_call_operand.vmem [shape: f32[2,24,1], index: 1, kind: input, shape index: {}]
  %s2 = inlined_call_operand.vmem [shape: f32[2,1,128], index: 2, kind: input, shape index: {}]
  %s3 = inlined_call_operand.hbm [shape: f32[1,1], index: 3, kind: output, shape index: {}]
  %s4 = sld [smem:[#allocation0]]
  $region30: #{_forward_impl.1} parent=0
    _
  %s6 = ssub.s32 1, %s4
  %s7 = scalar_select 0, %s6, %s4
  $region1: #{_forward_impl.1} parent=0
    #allocation3 [shape = 'u8[512]{0}', space=smem, size = 0x200, scoped, tag = 'output window, operand 0, single buffered']
    #allocation4 [shape = 's32[1]{0}', space=sflag, size = 0x4, scoped, tag = 'scoped memory for _forward_impl.1']
    %8 = vsyncpa [#allocation4], 0
    // Predicated region
    $region2: #{_forward_impl.1} parent=1 // pred_check
      _
    $region3: #{_forward_impl.1} parent=1 // pred_check_branch
      %10 = sbr.rel (0) target = $region5
    $region4: #{_forward_impl.1} parent=1 // pred_region
      _
    $region5: #{_forward_impl.1} parent=1 // pred_fallthru
      _
    // Predicated region
    $region6: #{_forward_impl.1} parent=1 // pred_check
      _
    $region7: #{_forward_impl.1} parent=1 // pred_check_branch
      %12 = sbr.rel (0) target = $region9
    $region8: #{_forward_impl.1} parent=1 // pred_region
      _
    $region9: #{_forward_impl.1} parent=1 // pred_fallthru
      _
    // Predicated region
    $region10: #{_forward_impl.1} parent=1 // pred_check
      _
    $region11: #{_forward_impl.1} parent=1 // pred_check_branch
      %14 = sbr.rel (0) target = $region13
    $region12: #{_forward_impl.1} parent=1 // pred_region
      _
    $region13: #{_forward_impl.1} parent=1 // pred_fallthru
      _
    %p15 = scmp.eq.s32.totalorder 0, 0
    // Predicated region
    $region14: #{_forward_impl.1} parent=1 // pred_check
      %p16 = pneg %p15
    $region15: #{_forward_impl.1} parent=1 // pred_check_branch
      %18 = sbr.rel (%p16) target = $region17
    $region16: #{_forward_impl.1} parent=1 // pred_region
      %19 = vst [vmem:[#allocation2] sm:$0x1] 0.0
    $region17: #{_forward_impl.1} parent=1 // pred_fallthru
      _
    %v20 = vld [vmem:[%s0] sm:$0xff]
    %v21 = vld [vmem:[%s0 + $0x8] sm:$0xff]
    %v22 = vld [vmem:[%s0 + $0x10] sm:$0xff]
    %v23 = vld [vmem:[%s0 + $0x18] sm:$0xff]
    %v24 = vld [vmem:[%s0 + $0x20] sm:$0xff]
    %v25 = vld [vmem:[%s0 + $0x28] sm:$0xff]
    %v26 = vld [vmem:[%s1] sm:$0xff]
    %v27 = vld [vmem:[%s1 + $0x8] sm:$0xff]
    %v28 = vld [vmem:[%s1 + $0x10] sm:$0xff]
    %v29 = vld [vmem:[%s1 + $0x18] sm:$0xff]
    %v30 = vld [vmem:[%s1 + $0x20] sm:$0xff]
    %v31 = vld [vmem:[%s1 + $0x28] sm:$0xff]
    %v32 = vld [vmem:[%s2] sm:$0x1]
    %v33 = vld [vmem:[%s2 + $0x1] sm:$0x1]
    %35 = vset.pattern.permute.xlu0 0
    %36 = vperm.xlu0 %35, %v26
    %v37 = vpop.permute.xlu0 %36
    %40 = vset.pattern.permute.xlu0 0
    %41 = vperm.xlu0 %40, %v27
    %v42 = vpop.permute.xlu0 %41
    %45 = vset.pattern.permute.xlu0 0
    %46 = vperm.xlu0 %45, %v28
    %v47 = vpop.permute.xlu0 %46
    %50 = vset.pattern.permute.xlu0 0
    %51 = vperm.xlu0 %50, %v29
    %v52 = vpop.permute.xlu0 %51
    %55 = vset.pattern.permute.xlu0 0
    %56 = vperm.xlu0 %55, %v30
    %v57 = vpop.permute.xlu0 %56
    %60 = vset.pattern.permute.xlu0 0
    %61 = vperm.xlu0 %60, %v31
    %v62 = vpop.permute.xlu0 %61
    %v64 = vmul.f32 %v20, %v37
    %v65 = vmul.f32 %v21, %v42
    %v66 = vmul.f32 %v22, %v47
    %v67 = vmul.f32 %v23, %v52
    %v68 = vmul.f32 %v24, %v57
    %v69 = vmul.f32 %v25, %v62
    %v70 = vadd.f32 %v64, %v65
    %v71 = vadd.f32 %v70, %v66
    %v72 = vrot.slane %v71, 4
    %v73 = vadd.f32 %v71, %v72
    %v74 = vrot.slane %v73, 2
    %v75 = vadd.f32 %v73, %v74
    %v76 = vrot.slane %v75, 1
    %v77 = vadd.f32 %v75, %v76
    %v78 = vadd.f32 %v67, %v68
    %v79 = vadd.f32 %v78, %v69
    %v80 = vrot.slane %v79, 4
    %v81 = vadd.f32 %v79, %v80
    %v82 = vrot.slane %v81, 2
    %v83 = vadd.f32 %v81, %v82
    %v84 = vrot.slane %v83, 1
    %v85 = vadd.f32 %v83, %v84
    %v86 = vsub.f32 %v77, %v32
    %v87 = vsub.f32 %v85, %v33
    %v88 = vld [vmem:[#allocation2] sm:$0x1]
    %v89 = vmul.f32 %v86, %v86
    %v90 = vmul.f32 %v87, %v87
    %v93 = vrot.slane %v90, 7
    %vm94 = vcmask 1041409
    %v95 = vsel %vm94, %v93, %v89
    %vm97 = vcmask 1041408
    %v98 = vsel %vm97, %v95, 0.0
    %v99 = vrot.slane %v98, 4
    %v100 = vadd.f32 %v98, %v99
    %v101 = vrot.slane %v100, 2
    %v102 = vadd.f32 %v100, %v101
    %v103 = vrot.slane %v102, 1
    %v104 = vadd.f32 %v102, %v103
    %v105 = vadd.f32 %v88, %v104
    %106 = vst [vmem:[#allocation2] sm:$0x1] %v105
    // Predicated region
    $region18: #{_forward_impl.1} parent=1 // pred_check
      %p107 = pneg %p15
    $region19: #{_forward_impl.1} parent=1 // pred_check_branch
      %109 = sbr.rel (%p107) target = $region21
    $region20: #{_forward_impl.1} parent=1 // pred_region
      %v110 = vld [vmem:[#allocation2] sm:$0x1]
      %vm111 = vcmask 1040384
      %v112 = vsel %vm111, %v110, 0.0
      %113 = vadd.xlane.f32.xlu0 %v112
      %v114 = vpop.xlane.xlu0 %113
      %v115 = vrot.slane %v114, 4
      %v116 = vadd.f32 %v114, %v115
      %v117 = vrot.slane %v116, 2
      %v118 = vadd.f32 %v116, %v117
      %v119 = vrot.slane %v118, 1
      %v120 = vadd.f32 %v118, %v119
      %s121 = vtos %v120
      %s122 = scalar_lea.smem [#allocation3], 0
      %123 = sst [smem:[%s122]] %s121
    $region21: #{_forward_impl.1} parent=1 // pred_fallthru
      _
    // Predicated region
    $region22: #{_forward_impl.1} parent=1 // pred_check
      _
    $region23: #{_forward_impl.1} parent=1 // pred_check_branch
      %125 = sbr.rel (0) target = $region25
    $region24: #{_forward_impl.1} parent=1 // pred_region
      %127 = vsyncadd [#allocation4], 0
      %s129 = sshll.u32 %s3, 4
      %s130 = int_to_ptr.hbm [resolvable:$true] %s129
      %132 = dma.smem_to_hbm [#allocation3], 16, %s130, [#allocation4]
    $region25: #{_forward_impl.1} parent=1 // pred_fallthru
      _
    // Predicated region
    $region26: #{_forward_impl.1} parent=1 // pred_check
      _
    $region27: #{_forward_impl.1} parent=1 // pred_check_branch
      %134 = sbr.rel (0) target = $region29
    $region28: #{_forward_impl.1} parent=1 // pred_region
      %136 = dma.done [#allocation4], 16
    $region29: #{_forward_impl.1} parent=1 // pred_fallthru
      _
    %137 = sfence
    %138 = vsyncpa [#allocation4], 1

</llo_original>
